<compile_context>
chip_gen: v5e
topology: v5e:2x2
jax: 0.10.0
libtpu: 0.0.40
codegen_flags: <defaults>
</compile_context>

<pallas_src>
import functools

import jax
import jax.numpy as jnp
from jax.experimental import pallas as pl
from jax.experimental.pallas import tpu as pltpu


# ----------------------------------------------------------------------------
# Kernel 1: fused Q/K/V projection (lane-dense 2-D matmuls, no head handling).
# ----------------------------------------------------------------------------
def qkv_proj_kernel(x_ref, w_ref, b_ref, q_ref, k_ref, v_ref, *, scaling):
    """x_ref: (1, tile_t, E); w_ref: (3, E, E) = [Wq.T | Wk.T | Wv.T];
    b_ref: (3, 1, E) f32; outputs: (1, tile_t, E) each in compute dtype."""
    x = x_ref[0]                                         # (tile_t, E)
    q = jnp.dot(x, w_ref[0], preferred_element_type=jnp.float32)
    q = (q + b_ref[0]) * scaling                         # bias then scale (torch order)
    k = jnp.dot(x, w_ref[1], preferred_element_type=jnp.float32) + b_ref[1]
    v = jnp.dot(x, w_ref[2], preferred_element_type=jnp.float32) + b_ref[2]
    q_ref[0] = q.astype(q_ref.dtype)
    k_ref[0] = k.astype(k_ref.dtype)
    v_ref[0] = v.astype(v_ref.dtype)


# ----------------------------------------------------------------------------
# Kernel 2: per-head flash attention with fused output projection.
# Grid: (B, num_q_tiles, H, num_kv_tiles); h/kv are accumulation axes.
# ----------------------------------------------------------------------------
def attn_kernel(q_ref, k_ref, v_ref, wo_ref, bo_ref, out_ref,
                m_ref, l_ref, acc_ref, *, compute_dtype, approx_recip):
    """q_ref: (1, 1, tq, hd); k_ref/v_ref: (1, 1, tkv, hd);
    wo_ref: (1, hd, E) head slab of Wo.T; bo_ref: (1, E); out_ref: (1, tq, E)."""
    cd = compute_dtype
    h = pl.program_id(2)
    ki = pl.program_id(3)

    @pl.when(ki == 0)
    def _init():
        m_ref[...] = jnp.full(m_ref.shape, -jnp.inf, jnp.float32)
        l_ref[...] = jnp.zeros(l_ref.shape, jnp.float32)
        acc_ref[...] = jnp.zeros(acc_ref.shape, jnp.float32)

    q = q_ref[0, 0]                                      # (tq, hd)  compute dtype
    k = k_ref[0, 0]                                      # (tkv, hd)
    v = v_ref[0, 0]                                      # (tkv, hd)

    # Scores for this KV tile (Q already carries the 1/sqrt(hd) scaling).
    s = jnp.einsum('qd,kd->qk', q, k,
                   preferred_element_type=jnp.float32)   # (tq, tkv) f32

    m_prev = m_ref[...]
    m_new = jnp.maximum(m_prev, jnp.max(s, axis=-1, keepdims=True))
    alpha = jnp.exp(m_prev - m_new)
    p = jnp.exp(s - m_new)
    l_ref[...] = alpha * l_ref[...] + jnp.sum(p, axis=-1, keepdims=True)
    acc_ref[...] = alpha * acc_ref[...] + jnp.einsum(
        'qk,kd->qd', p.astype(cd), v, preferred_element_type=jnp.float32)
    m_ref[...] = m_new

    @pl.when(ki == pl.num_programs(3) - 1)
    def _finalize():
        # Normalize, then fuse this head's contribution to the output
        # projection and accumulate into the resident (tq, E) output block.
        o_h = acc_ref[...] * pl.reciprocal(l_ref[...], approx=approx_recip)
        partial = jnp.dot(o_h.astype(cd), wo_ref[0],
                          preferred_element_type=jnp.float32)        # (tq, E)

        @pl.when(h == 0)
        def _():
            out_ref[0] = (partial + bo_ref[...]).astype(out_ref.dtype)

        @pl.when(h > 0)
        def _():
            out_ref[0] = out_ref[0] + partial.astype(out_ref.dtype)


def _pick_block(dim, candidates):
    for c in candidates:
        if dim % c == 0:
            return c
    return dim   # full extent is always a legal block


def multi_head_attention(hidden_states, params, *, num_heads,
                         compute_dtype=jnp.bfloat16,
                         q_block=None, kv_block=None, t_block=None):
    """Pallas forward.  hidden_states: [B, T, E].  params = (wq, bq, wk, bk,
    wv, bv, wo, bo) with torch Linear layout (weight: [out, in])."""
    B, T, E = hidden_states.shape
    head_dim = E // num_heads
    assert head_dim * num_heads == E
    scaling = head_dim ** (-0.5)
    cd = compute_dtype
    out_dtype = hidden_states.dtype
    approx_recip = jnp.dtype(cd) != jnp.dtype(jnp.float32)

    wq, bq, wk, bk, wv, bv, wo, bo = params

    # torch Linear computes x @ W.T; stack the transposed Q/K/V weights on a
    # leading axis (no lane slicing in-kernel) and cast to the compute dtype.
    wqkv = jnp.stack([wq.T, wk.T, wv.T], axis=0).astype(cd)            # (3, E, E)
    bqkv = jnp.stack([bq, bk, bv], axis=0).reshape(3, 1, E).astype(jnp.float32)
    wo_r = wo.T.reshape(num_heads, head_dim, E).astype(cd)             # (H, hd, E)
    bo_r = bo.reshape(1, E).astype(jnp.float32)

    # Pre-cast activations once (halves HBM->VMEM DMA in the bf16 path).
    x = hidden_states.astype(cd)

    # ---------------- Kernel 1: Q/K/V projection ----------------
    if t_block is None:
        t_block = _pick_block(T, (256, 128))
    num_t = T // t_block

    x_spec = pl.BlockSpec((1, t_block, E), lambda b, ti: (b, ti, 0))
    proj_flops = int(6 * B * T * E * E)
    proj_bytes = int(x.size * x.dtype.itemsize
                     + wqkv.size * wqkv.dtype.itemsize + bqkv.size * 4
                     + 3 * B * T * E * jnp.dtype(cd).itemsize)

    q_l, k_l, v_l = pl.pallas_call(
        functools.partial(qkv_proj_kernel, scaling=scaling),
        out_shape=(jax.ShapeDtypeStruct((B, T, E), cd),
                   jax.ShapeDtypeStruct((B, T, E), cd),
                   jax.ShapeDtypeStruct((B, T, E), cd)),
        grid=(B, num_t),
        in_specs=[
            x_spec,
            pl.BlockSpec((3, E, E), lambda b, ti: (0, 0, 0)),
            pl.BlockSpec((3, 1, E), lambda b, ti: (0, 0, 0)),
        ],
        out_specs=(x_spec, x_spec, x_spec),
        compiler_params=pltpu.CompilerParams(
            dimension_semantics=("parallel", "parallel"),
            vmem_limit_bytes=64 * 1024 * 1024),
        cost_estimate=pl.CostEstimate(flops=proj_flops, transcendentals=0,
                                      bytes_accessed=proj_bytes),
    )(x, wqkv, bqkv)

    # Head split is layout plumbing outside the kernels (no in-kernel reshape).
    def to_heads(t):   # (B, T, E) -> (B, H, T, hd)
        return t.reshape(B, T, num_heads, head_dim).transpose(0, 2, 1, 3)

    q_h, k_h, v_h = to_heads(q_l), to_heads(k_l), to_heads(v_l)

    # ---------------- Kernel 2: flash attention + output projection ----------
    if q_block is None:
        q_block = _pick_block(T, (128, 256))
    if kv_block is None:
        kv_block = _pick_block(T, (256, 128))
    num_q = T // q_block
    num_kv = T // kv_block

    attn_flops = int(4 * B * num_heads * T * T * head_dim + 2 * B * T * E * E)
    attn_trans = int(B * num_heads * T * T)
    attn_bytes = int(B * T * E * jnp.dtype(cd).itemsize * (1 + 2 * num_q)
                     + (wo_r.size + E) * 4
                     + B * T * E * jnp.dtype(out_dtype).itemsize)

    kernel = functools.partial(attn_kernel, compute_dtype=cd,
                               approx_recip=approx_recip)

    return pl.pallas_call(
        kernel,
        out_shape=jax.ShapeDtypeStruct((B, T, E), out_dtype),
        grid=(B, num_q, num_heads, num_kv),
        in_specs=[
            pl.BlockSpec((1, 1, q_block, head_dim),
                         lambda b, qi, h, ki: (b, h, qi, 0)),
            pl.BlockSpec((1, 1, kv_block, head_dim),
                         lambda b, qi, h, ki: (b, h, ki, 0)),
            pl.BlockSpec((1, 1, kv_block, head_dim),
                         lambda b, qi, h, ki: (b, h, ki, 0)),
            pl.BlockSpec((1, head_dim, E), lambda b, qi, h, ki: (h, 0, 0)),
            pl.BlockSpec((1, E), lambda b, qi, h, ki: (0, 0)),
        ],
        out_specs=pl.BlockSpec((1, q_block, E), lambda b, qi, h, ki: (b, qi, 0)),
        scratch_shapes=[
            pltpu.VMEM((q_block, 1), jnp.float32),          # running max m
            pltpu.VMEM((q_block, 1), jnp.float32),          # running denom l
            pltpu.VMEM((q_block, head_dim), jnp.float32),   # running acc
        ],
        compiler_params=pltpu.CompilerParams(
            dimension_semantics=("parallel", "parallel", "arbitrary", "arbitrary"),
            vmem_limit_bytes=64 * 1024 * 1024),
        cost_estimate=pl.CostEstimate(flops=attn_flops, transcendentals=attn_trans,
                                      bytes_accessed=attn_bytes),
    )(q_h, k_h, v_h, wo_r, bo_r)


def mha_reference(x, params, *, num_heads):
    """Pure-JAX reference mirroring the PyTorch forward (self-attention path)."""
    B, T, E = x.shape
    hd = E // num_heads
    scaling = hd ** (-0.5)
    wq, bq, wk, bk, wv, bv, wo, bo = params

    q = (x @ wq.T + bq) * scaling
    k = x @ wk.T + bk
    v = x @ wv.T + bv

    def shape(t):  # (B,T,E) -> (B*H, T, hd)
        return t.reshape(B, T, num_heads, hd).transpose(0, 2, 1, 3).reshape(
            B * num_heads, T, hd)

    q, k, v = shape(q), shape(k), shape(v)
    attn_w = jnp.einsum('bqd,bkd->bqk', q, k)
    attn_w = jax.nn.softmax(attn_w, axis=-1)
    attn_o = jnp.einsum('bqk,bkd->bqd', attn_w, v)
    attn_o = attn_o.reshape(B, num_heads, T, hd).transpose(0, 2, 1, 3).reshape(B, T, E)
    return attn_o @ wo.T + bo


if __name__ == "__main__":
    # Small shapes consistent with the module: batch=2, seq=8, embed=32, heads=4.
    B, T, E, H = 2, 8, 32, 4
    init_std = 0.01

    key = jax.random.PRNGKey(0)
    kx, kq, kk, kvk, ko = jax.random.split(key, 5)

    hidden_states = jax.random.normal(kx, (B, T, E), dtype=jnp.float32)

    # Deterministic parameter init matching _init_all_weights:
    # weights ~ Normal(0, init_std), biases zero.  torch Linear weight: [out, in].
    wq = init_std * jax.random.normal(kq, (E, E), dtype=jnp.float32)
    wk = init_std * jax.random.normal(kk, (E, E), dtype=jnp.float32)
    wv = init_std * jax.random.normal(kvk, (E, E), dtype=jnp.float32)
    wo = init_std * jax.random.normal(ko, (E, E), dtype=jnp.float32)
    bq = jnp.zeros((E,), jnp.float32)
    bk = jnp.zeros((E,), jnp.float32)
    bv = jnp.zeros((E,), jnp.float32)
    bo = jnp.zeros((E,), jnp.float32)
    params = (wq, bq, wk, bk, wv, bv, wo, bo)

    ref = mha_reference(hidden_states, params, num_heads=H)

    # Exact (f32) path: tight check against the pure-JAX reference.
    out_f32 = jax.block_until_ready(
        multi_head_attention(hidden_states, params, num_heads=H,
                             compute_dtype=jnp.float32))
    assert out_f32.shape == (B, T, E)
    assert jnp.allclose(out_f32, ref, atol=5e-5, rtol=5e-4), \
        "f32 mismatch vs JAX reference"

    # Fast path (bf16 MXU operands, f32 accumulation): looser numeric check.
    out_bf16 = jax.block_until_ready(
        multi_head_attention(hidden_states, params, num_heads=H,
                             compute_dtype=jnp.bfloat16))
    assert out_bf16.shape == (B, T, E)
    assert jnp.allclose(out_bf16, ref, atol=2e-3, rtol=2e-2), \
        "bf16 mismatch vs JAX reference"

    print("KERNEL_OK")
</pallas_src>

<mosaic_0001>
module attributes {stable_mosaic.version = 11 : i64} {
  func.func @qkv_proj_kernel(%arg0: i32, %arg1: i32, %arg2: memref<1x8x32xf32, #tpu.memory_space<vmem>>, %arg3: memref<3x32x32xf32, #tpu.memory_space<vmem>>, %arg4: memref<3x1x32xf32, #tpu.memory_space<vmem>>, %arg5: memref<1x8x32xf32, #tpu.memory_space<vmem>>, %arg6: memref<1x8x32xf32, #tpu.memory_space<vmem>>, %arg7: memref<1x8x32xf32, #tpu.memory_space<vmem>>) attributes {dimension_semantics = [#tpu.dimension_semantics<parallel>, #tpu.dimension_semantics<parallel>], iteration_bounds = array<i64: 2, 1>, scalar_prefetch = 0 : i64, scratch_operands = 0 : i64, tpu.core_type = #tpu.core_type<tc>, window_params = [{transform_indices = @transform_0, window_bounds = array<i64: 1, 8, 32>}, {pipeline_mode = #tpu.pipeline_mode<synchronous>, transform_indices = @transform_1, window_bounds = array<i64: 3, 32, 32>}, {pipeline_mode = #tpu.pipeline_mode<synchronous>, transform_indices = @transform_2, window_bounds = array<i64: 3, 1, 32>}, {transform_indices = @transform_3, window_bounds = array<i64: 1, 8, 32>}, {transform_indices = @transform_4, window_bounds = array<i64: 1, 8, 32>}, {transform_indices = @transform_5, window_bounds = array<i64: 1, 8, 32>}]} {
    %c0 = arith.constant 0 : index
    %c0_0 = arith.constant 0 : index
    %c0_1 = arith.constant 0 : index
    %0 = vector.load %arg2[%c0, %c0_0, %c0_1] : memref<1x8x32xf32, #tpu.memory_space<vmem>>, vector<1x8x32xf32>
    %1 = vector.shape_cast %0 : vector<1x8x32xf32> to vector<8x32xf32>
    %c0_2 = arith.constant 0 : index
    %c0_3 = arith.constant 0 : index
    %c0_4 = arith.constant 0 : index
    %2 = vector.load %arg3[%c0_2, %c0_3, %c0_4] : memref<3x32x32xf32, #tpu.memory_space<vmem>>, vector<1x32x32xf32>
    %3 = vector.shape_cast %2 : vector<1x32x32xf32> to vector<32x32xf32>
    %cst = arith.constant dense<0.000000e+00> : vector<8x32xf32>
    %4 = tpu.matmul %1, %3, %cst {dimension_numbers = #tpu.dot_dimension_numbers<[1], [0], [0], [1], [0, 0, 1, 1], [], []>} : vector<8x32xf32>, vector<32x32xf32>, vector<8x32xf32> -> vector<8x32xf32>
    %c0_5 = arith.constant 0 : index
    %c0_6 = arith.constant 0 : index
    %c0_7 = arith.constant 0 : index
    %5 = vector.load %arg4[%c0_5, %c0_6, %c0_7] : memref<3x1x32xf32, #tpu.memory_space<vmem>>, vector<1x1x32xf32>
    %6 = vector.shape_cast %5 : vector<1x1x32xf32> to vector<1x32xf32>
    %7 = vector.broadcast %6 : vector<1x32xf32> to vector<8x32xf32>
    %8 = arith.addf %4, %7 : vector<8x32xf32>
    %cst_8 = arith.constant 0.353553385 : f32
    %9 = vector.broadcast %cst_8 : f32 to vector<8x32xf32>
    %10 = arith.mulf %8, %9 : vector<8x32xf32>
    %c1 = arith.constant 1 : index
    %c0_9 = arith.constant 0 : index
    %c0_10 = arith.constant 0 : index
    %11 = vector.load %arg3[%c1, %c0_9, %c0_10] : memref<3x32x32xf32, #tpu.memory_space<vmem>>, vector<1x32x32xf32>
    %12 = vector.shape_cast %11 : vector<1x32x32xf32> to vector<32x32xf32>
    %cst_11 = arith.constant dense<0.000000e+00> : vector<8x32xf32>
    %13 = tpu.matmul %1, %12, %cst_11 {dimension_numbers = #tpu.dot_dimension_numbers<[1], [0], [0], [1], [0, 0, 1, 1], [], []>} : vector<8x32xf32>, vector<32x32xf32>, vector<8x32xf32> -> vector<8x32xf32>
    %c1_12 = arith.constant 1 : index
    %c0_13 = arith.constant 0 : index
    %c0_14 = arith.constant 0 : index
    %14 = vector.load %arg4[%c1_12, %c0_13, %c0_14] : memref<3x1x32xf32, #tpu.memory_space<vmem>>, vector<1x1x32xf32>
    %15 = vector.shape_cast %14 : vector<1x1x32xf32> to vector<1x32xf32>
    %16 = vector.broadcast %15 : vector<1x32xf32> to vector<8x32xf32>
    %17 = arith.addf %13, %16 : vector<8x32xf32>
    %c2 = arith.constant 2 : index
    %c0_15 = arith.constant 0 : index
    %c0_16 = arith.constant 0 : index
    %18 = vector.load %arg3[%c2, %c0_15, %c0_16] : memref<3x32x32xf32, #tpu.memory_space<vmem>>, vector<1x32x32xf32>
    %19 = vector.shape_cast %18 : vector<1x32x32xf32> to vector<32x32xf32>
    %cst_17 = arith.constant dense<0.000000e+00> : vector<8x32xf32>
    %20 = tpu.matmul %1, %19, %cst_17 {dimension_numbers = #tpu.dot_dimension_numbers<[1], [0], [0], [1], [0, 0, 1, 1], [], []>} : vector<8x32xf32>, vector<32x32xf32>, vector<8x32xf32> -> vector<8x32xf32>
    %c2_18 = arith.constant 2 : index
    %c0_19 = arith.constant 0 : index
    %c0_20 = arith.constant 0 : index
    %21 = vector.load %arg4[%c2_18, %c0_19, %c0_20] : memref<3x1x32xf32, #tpu.memory_space<vmem>>, vector<1x1x32xf32>
    %22 = vector.shape_cast %21 : vector<1x1x32xf32> to vector<1x32xf32>
    %23 = vector.broadcast %22 : vector<1x32xf32> to vector<8x32xf32>
    %24 = arith.addf %20, %23 : vector<8x32xf32>
    %c0_21 = arith.constant 0 : index
    %c0_22 = arith.constant 0 : index
    %c0_23 = arith.constant 0 : index
    %25 = vector.load %arg5[%c0_21, %c0_22, %c0_23] : memref<1x8x32xf32, #tpu.memory_space<vmem>>, vector<1x8x32xf32>
    %26 = vector.shape_cast %25 : vector<1x8x32xf32> to vector<8x32xf32>
    %27 = vector.shape_cast %10 : vector<8x32xf32> to vector<1x8x32xf32>
    tpu.vector_store %arg5[%c0_21, %c0_22, %c0_23], %27 {strides = array<i32>} : memref<1x8x32xf32, #tpu.memory_space<vmem>>, vector<1x8x32xf32>,
    %c0_24 = arith.constant 0 : index
    %c0_25 = arith.constant 0 : index
    %c0_26 = arith.constant 0 : index
    %28 = vector.load %arg6[%c0_24, %c0_25, %c0_26] : memref<1x8x32xf32, #tpu.memory_space<vmem>>, vector<1x8x32xf32>
    %29 = vector.shape_cast %28 : vector<1x8x32xf32> to vector<8x32xf32>
    %30 = vector.shape_cast %17 : vector<8x32xf32> to vector<1x8x32xf32>
    tpu.vector_store %arg6[%c0_24, %c0_25, %c0_26], %30 {strides = array<i32>} : memref<1x8x32xf32, #tpu.memory_space<vmem>>, vector<1x8x32xf32>,
    %c0_27 = arith.constant 0 : index
    %c0_28 = arith.constant 0 : index
    %c0_29 = arith.constant 0 : index
    %31 = vector.load %arg7[%c0_27, %c0_28, %c0_29] : memref<1x8x32xf32, #tpu.memory_space<vmem>>, vector<1x8x32xf32>
    %32 = vector.shape_cast %31 : vector<1x8x32xf32> to vector<8x32xf32>
    %33 = vector.shape_cast %24 : vector<8x32xf32> to vector<1x8x32xf32>
    tpu.vector_store %arg7[%c0_27, %c0_28, %c0_29], %33 {strides = array<i32>} : memref<1x8x32xf32, #tpu.memory_space<vmem>>, vector<1x8x32xf32>,
    return
  }
  func.func @transform_0(%arg0: i32, %arg1: i32) -> (i32, i32, i32) {
    %c0_i32 = arith.constant 0 : i32
    %c0_i32_0 = arith.constant 0 : i32
    return %arg0, %arg1, %c0_i32 : i32, i32, i32
  }
  func.func @transform_1(%arg0: i32, %arg1: i32) -> (i32, i32, i32) {
    %c0_i32 = arith.constant 0 : i32
    %c0_i32_0 = arith.constant 0 : i32
    %c0_i32_1 = arith.constant 0 : i32
    %c0_i32_2 = arith.constant 0 : i32
    return %c0_i32, %c0_i32_0, %c0_i32_1 : i32, i32, i32
  }
  func.func @transform_2(%arg0: i32, %arg1: i32) -> (i32, i32, i32) {
    %c0_i32 = arith.constant 0 : i32
    %c0_i32_0 = arith.constant 0 : i32
    %c0_i32_1 = arith.constant 0 : i32
    %c0_i32_2 = arith.constant 0 : i32
    return %c0_i32, %c0_i32_0, %c0_i32_1 : i32, i32, i32
  }
  func.func @transform_3(%arg0: i32, %arg1: i32) -> (i32, i32, i32) {
    %c0_i32 = arith.constant 0 : i32
    %c0_i32_0 = arith.constant 0 : i32
    return %arg0, %arg1, %c0_i32 : i32, i32, i32
  }
  func.func @transform_4(%arg0: i32, %arg1: i32) -> (i32, i32, i32) {
    %c0_i32 = arith.constant 0 : i32
    %c0_i32_0 = arith.constant 0 : i32
    return %arg0, %arg1, %c0_i32 : i32, i32, i32
  }
  func.func @transform_5(%arg0: i32, %arg1: i32) -> (i32, i32, i32) {
    %c0_i32 = arith.constant 0 : i32
    %c0_i32_0 = arith.constant 0 : i32
    return %arg0, %arg1, %c0_i32 : i32, i32, i32
  }
}

</mosaic_0001>

<llo_original>
// kernel: tpu_custom_call.1
$region0: #{tpu_custom_call.1}
  #allocation0 [shape = 'u32[]', space=smem, size = 0x4, offset = 0x4, fixed_abs, tag = 'smem constant byte address 0x4 - core index']
  #allocation1 [shape = 'u32[72,128]{1,0:T(1,128)}', space=vmem, size = 0x9000, scoped, tag = 'internal scratch']
  %s0 = inlined_call_operand.hbm [shape: f32[2,8,32], index: 0, kind: input, shape index: {}]
  %s1 = inlined_call_operand.hbm [shape: f32[3,32,32], index: 1, kind: input, shape index: {}]
  %s2 = inlined_call_operand.hbm [shape: f32[3,1,32], index: 2, kind: input, shape index: {}]
  %s3 = inlined_call_operand.hbm [shape: f32[2,8,32], index: 3, kind: output, shape index: {0}]
  %s4 = inlined_call_operand.hbm [shape: f32[2,8,32], index: 4, kind: output, shape index: {1}]
  %s5 = inlined_call_operand.hbm [shape: f32[2,8,32], index: 5, kind: output, shape index: {2}]
  %6 = xla_tuple %s3, %s4, %s5
  %s7 = sld [smem:[#allocation0]]
  $region73: #{tpu_custom_call.1} parent=0
    _
  %s9 = ssub.s32 1, %s7
  %s10 = scalar_select 0, %s9, %s7
  $region1: #{tpu_custom_call.1} parent=0
    #allocation2 [shape = 'u8[8192]{0}', space=vmem, size = 0x2000, scoped, tag = 'input window, operand 0']
    #allocation3 [shape = 's32[2]{0}', space=sflag, size = 0x8, scoped, tag = 'scoped memory for tpu_custom_call.1']
    #allocation4 [shape = 's32[2]{0}', space=sflag, size = 0x8, scoped, tag = 'scoped memory for tpu_custom_call.1']
    #allocation5 [shape = 'u8[49152]{0}', space=vmem, size = 0xc000, scoped, tag = 'input window, operand 1, single buffered']
    #allocation6 [shape = 's32[1]{0}', space=sflag, size = 0x4, scoped, tag = 'scoped memory for tpu_custom_call.1']
    #allocation7 [shape = 'u8[1536]{0}', space=vmem, size = 0x800, scoped, tag = 'input window, operand 2, single buffered']
    #allocation8 [shape = 'u8[8192]{0}', space=vmem, size = 0x2000, scoped, tag = 'output window, operand 0']
    #allocation9 [shape = 'u8[8192]{0}', space=vmem, size = 0x2000, scoped, tag = 'output window, operand 1']
    #allocation10 [shape = 's32[2]{0}', space=sflag, size = 0x8, scoped, tag = 'scoped memory for tpu_custom_call.1']
    #allocation11 [shape = 'u8[8192]{0}', space=vmem, size = 0x2000, scoped, tag = 'output window, operand 2']
    %11 = vsyncpa [#allocation3], 0
    %s12 = scalar_lea.sflag [#allocation3], 1
    %13 = vsyncpa %s12, 0
    %14 = vsyncpa [#allocation6], 0
    %15 = vsyncpa [#allocation4], 0
    %s16 = scalar_lea.sflag [#allocation4], 1
    %17 = vsyncpa %s16, 0
    %18 = vsyncpa [#allocation10], 0
    %s19 = scalar_lea.sflag [#allocation10], 1
    %20 = vsyncpa %s19, 0
    loop: start=0, step=1, limit=4
    $region2: #{tpu_custom_call.1} parent=1 // loop_pre_header
      _
    $region3: #{tpu_custom_call.1} parent=1 // loop_header
      %s22 = sphi 0, %s26
      %p23 = scmp.ge.s32.totalorder %s22, 4
      %s29 = sphi 0, %s41
      %s30 = sphi 0, %s37
      %s31 = sphi 0, %s29
      %s32 = sphi 0, %s30
      %s33 = sphi 0, %s31
      %s34 = sphi 0, %s32
      %s46 = sphi 0, %s48
      %s49 = sphi 0, %s46
      %s50 = sphi 0, %s49
      %s66 = sphi 0, %s50
      %s70 = sphi 0, %s70
      %s72 = sphi 0, %s70
      %s73 = sphi 0, %s72
      %s87 = sphi 0, %s73
      %s91 = sphi 0, %s91
      %s93 = sphi 0, %s91
      %s94 = sphi 0, %s93
      %s108 = sphi 0, %s94
      %s116 = sphi 0, %s118
      %s119 = sphi 0, %s116
      %s120 = sphi 0, %s119
      %s136 = sphi 0, %s120
      %s144 = sphi 0, %s146
      %s147 = sphi 0, %s144
      %s148 = sphi 0, %s147
      %s164 = sphi 0, %s148
      %s172 = sphi 0, %s174
      %s175 = sphi 0, %s172
      %s176 = sphi 0, %s175
      %s192 = sphi 0, %s176
    $region4: #{tpu_custom_call.1} parent=1 // loop_header_branch
      %25 = sbr.rel (%p23) target = $region8
    $region5: #{tpu_custom_call.1} parent=1 // loop_body
      %s27 = ssub.s32 %s22, 1
      %s28 = ssub.s32 %s22, 2
      %s35 = sadd.s32 1, %s30
      %p36 = scmp.ge.s32.totalorder %s35, 1
      %s37 = scalar_select %p36, 0, %s35
      %s38 = sadd.s32 1, %s29
      %s39 = scalar_select %p36, %s38, %s29
      %p40 = scmp.ge.s32.totalorder %s39, 2
      %s41 = scalar_select %p40, 0, %s39
      %s42 = ssub.s32 %s29, %s41
      %s43 = ssub.s32 %s30, %s37
      %s44 = sor.u32 %s42, %s43
      %p45 = scmp.eq.s32.totalorder %s44, 0
      %s47 = sadd.s32 %s46, 1
      %s48 = scalar_select %p45, %s46, %s47
      %p51 = pneg %p45
      %p52 = scmp.eq.s32.totalorder %s22, 1
      %p53 = por %p51, %p52
      %p54 = scmp.ne.s32.totalorder %s46, %s49
      %p55 = scmp.eq.s32.totalorder %s22, 0
      %p56 = por %p54, %p55
      %p57 = scmp.ne.s32.totalorder %s46, %s49
      %p58 = scmp.eq.s32.totalorder %s27, 1
      %p59 = por %p57, %p58
      %p60 = scmp.ne.s32.totalorder %s49, %s50
      %p61 = scmp.eq.s32.totalorder %s27, 0
      %p62 = por %p60, %p61
      %p63 = scmp.ne.s32.totalorder %s49, %s50
      %p64 = scmp.eq.s32.totalorder %s28, 1
      %p65 = por %p63, %p64
      %p67 = scmp.ne.s32.totalorder %s50, %s66
      %p68 = scmp.eq.s32.totalorder %s28, 0
      %p69 = por %p67, %p68
      %s71 = sadd.s32 %s70, 1
      %p74 = scmp.eq.s32.totalorder %s22, 1
      %p75 = scmp.ne.s32.totalorder %s70, %s72
      %p76 = scmp.eq.s32.totalorder %s22, 0
      %p77 = por %p75, %p76
      %p78 = scmp.ne.s32.totalorder %s70, %s72
      %p79 = scmp.eq.s32.totalorder %s27, 1
      %p80 = por %p78, %p79
      %p81 = scmp.ne.s32.totalorder %s72, %s73
      %p82 = scmp.eq.s32.totalorder %s27, 0
      %p83 = por %p81, %p82
      %p84 = scmp.ne.s32.totalorder %s72, %s73
      %p85 = scmp.eq.s32.totalorder %s28, 1
      %p86 = por %p84, %p85
      %p88 = scmp.ne.s32.totalorder %s73, %s87
      %p89 = scmp.eq.s32.totalorder %s28, 0
      %p90 = por %p88, %p89
      %s92 = sadd.s32 %s91, 1
      %p95 = scmp.eq.s32.totalorder %s22, 1
      %p96 = scmp.ne.s32.totalorder %s91, %s93
      %p97 = scmp.eq.s32.totalorder %s22, 0
      %p98 = por %p96, %p97
      %p99 = scmp.ne.s32.totalorder %s91, %s93
      %p100 = scmp.eq.s32.totalorder %s27, 1
      %p101 = por %p99, %p100
      %p102 = scmp.ne.s32.totalorder %s93, %s94
      %p103 = scmp.eq.s32.totalorder %s27, 0
      %p104 = por %p102, %p103
      %p105 = scmp.ne.s32.totalorder %s93, %s94
      %p106 = scmp.eq.s32.totalorder %s28, 1
      %p107 = por %p105, %p106
      %p109 = scmp.ne.s32.totalorder %s94, %s108
      %p110 = scmp.eq.s32.totalorder %s28, 0
      %p111 = por %p109, %p110
      %s112 = ssub.s32 %s29, %s41
      %s113 = ssub.s32 %s30, %s37
      %s114 = sor.u32 %s112, %s113
      %p115 = scmp.eq.s32.totalorder %s114, 0
      %s117 = sadd.s32 %s116, 1
      %s118 = scalar_select %p115, %s116, %s117
      %p121 = pneg %p115
      %p122 = scmp.eq.s32.totalorder %s22, 1
      %p123 = por %p121, %p122
      %p124 = scmp.ne.s32.totalorder %s116, %s119
      %p125 = scmp.eq.s32.totalorder %s22, 0
      %p126 = por %p124, %p125
      %p127 = scmp.ne.s32.totalorder %s116, %s119
      %p128 = scmp.eq.s32.totalorder %s27, 1
      %p129 = por %p127, %p128
      %p130 = scmp.ne.s32.totalorder %s119, %s120
      %p131 = scmp.eq.s32.totalorder %s27, 0
      %p132 = por %p130, %p131
      %p133 = scmp.ne.s32.totalorder %s119, %s120
      %p134 = scmp.eq.s32.totalorder %s28, 1
      %p135 = por %p133, %p134
      %p137 = scmp.ne.s32.totalorder %s120, %s136
      %p138 = scmp.eq.s32.totalorder %s28, 0
      %p139 = por %p137, %p138
      %s140 = ssub.s32 %s29, %s41
      %s141 = ssub.s32 %s30, %s37
      %s142 = sor.u32 %s140, %s141
      %p143 = scmp.eq.s32.totalorder %s142, 0
      %s145 = sadd.s32 %s144, 1
      %s146 = scalar_select %p143, %s144, %s145
      %p149 = pneg %p143
      %p150 = scmp.eq.s32.totalorder %s22, 1
      %p151 = por %p149, %p150
      %p152 = scmp.ne.s32.totalorder %s144, %s147
      %p153 = scmp.eq.s32.totalorder %s22, 0
      %p154 = por %p152, %p153
      %p155 = scmp.ne.s32.totalorder %s144, %s147
      %p156 = scmp.eq.s32.totalorder %s27, 1
      %p157 = por %p155, %p156
      %p158 = scmp.ne.s32.totalorder %s147, %s148
      %p159 = scmp.eq.s32.totalorder %s27, 0
      %p160 = por %p158, %p159
      %p161 = scmp.ne.s32.totalorder %s147, %s148
      %p162 = scmp.eq.s32.totalorder %s28, 1
      %p163 = por %p161, %p162
      %p165 = scmp.ne.s32.totalorder %s148, %s164
      %p166 = scmp.eq.s32.totalorder %s28, 0
      %p167 = por %p165, %p166
      %s168 = ssub.s32 %s29, %s41
      %s169 = ssub.s32 %s30, %s37
      %s170 = sor.u32 %s168, %s169
      %p171 = scmp.eq.s32.totalorder %s170, 0
      %s173 = sadd.s32 %s172, 1
      %s174 = scalar_select %p171, %s172, %s173
      %p177 = pneg %p171
      %p178 = scmp.eq.s32.totalorder %s22, 1
      %p179 = por %p177, %p178
      %p180 = scmp.ne.s32.totalorder %s172, %s175
      %p181 = scmp.eq.s32.totalorder %s22, 0
      %p182 = por %p180, %p181
      %p183 = scmp.ne.s32.totalorder %s172, %s175
      %p184 = scmp.eq.s32.totalorder %s27, 1
      %p185 = por %p183, %p184
      %p186 = scmp.ne.s32.totalorder %s175, %s176
      %p187 = scmp.eq.s32.totalorder %s27, 0
      %p188 = por %p186, %p187
      %p189 = scmp.ne.s32.totalorder %s175, %s176
      %p190 = scmp.eq.s32.totalorder %s28, 1
      %p191 = por %p189, %p190
      %p193 = scmp.ne.s32.totalorder %s176, %s192
      %p194 = scmp.eq.s32.totalorder %s28, 0
      %p195 = por %p193, %p194
      %p196 = scmp.le.s32.totalorder 1, %s22
      %p197 = scmp.lt.s32.totalorder %s22, 3
      %p198 = pnand %p196, %p197
      %p199 = pneg %p198
      // Predicated region
      $region9: #{tpu_custom_call.1} parent=5 // pred_check
        _
      $region10: #{tpu_custom_call.1} parent=5 // pred_check_branch
        %201 = sbr.rel (%p198) target = $region12
      $region11: #{tpu_custom_call.1} parent=5 // pred_region
        %s202 = ssub.s32 %s22, 1
        // Predicated region
        $region13: #{tpu_custom_call.1} parent=11 // pred_check
          %p203 = pneg %p83
        $region14: #{tpu_custom_call.1} parent=11 // pred_check_branch
          %205 = sbr.rel (%p203) target = $region16
        $region15: #{tpu_custom_call.1} parent=11 // pred_region
          %207 = vsyncadd [#allocation6], 0
          %s208 = sshll.u32 %s1, 4
          %s209 = int_to_ptr.hbm [resolvable:$true] %s208
          %s210 = sshll.u32 [#allocation5], 4
          %s211 = int_to_ptr.vmem [resolvable:$true] %s210
          %216 = dma.hbm_to_vmem [thread:$0]  %s209, 1536, %s211, [#allocation6], 128, 128, 8
        $region16: #{tpu_custom_call.1} parent=11 // pred_fallthru
          _
        // Predicated region
        $region17: #{tpu_custom_call.1} parent=11 // pred_check
          %p217 = pneg %p104
        $region18: #{tpu_custom_call.1} parent=11 // pred_check_branch
          %219 = sbr.rel (%p217) target = $region20
        $region19: #{tpu_custom_call.1} parent=11 // pred_region
          %221 = vsyncadd [#allocation6], 0
          %s222 = sshll.u32 %s2, 4
          %s223 = int_to_ptr.hbm [resolvable:$true] %s222
          %s224 = sshll.u32 [#allocation7], 4
          %s225 = int_to_ptr.vmem [resolvable:$true] %s224
          %230 = dma.hbm_to_vmem [thread:$0]  %s223, 48, %s225, [#allocation6], 16, 16, 1
        $region20: #{tpu_custom_call.1} parent=11 // pred_fallthru
          _
      $region12: #{tpu_custom_call.1} parent=5 // pred_fallthru
        _
      %p231 = scmp.lt.s32.totalorder %s22, 2
      // Predicated region
      $region21: #{tpu_custom_call.1} parent=5 // pred_check
        %p232 = pneg %p231
      $region22: #{tpu_custom_call.1} parent=5 // pred_check_branch
        %234 = sbr.rel (%p232) target = $region24
      $region23: #{tpu_custom_call.1} parent=5 // pred_region
        // Predicated region
        $region25: #{tpu_custom_call.1} parent=23 // pred_check
          %p235 = pneg %p56
        $region26: #{tpu_custom_call.1} parent=23 // pred_check_branch
          %237 = sbr.rel (%p235) target = $region28
        $region27: #{tpu_custom_call.1} parent=23 // pred_region
          %s238 = sand.u32 %s46, 1
          %s239 = scalar_lea.sflag [#allocation3], %s238
          %s240 = sand.u32 %s46, 1
          %s241 = smul.addr %s240, 8
          %s242 = scalar_lea.vmem [#allocation2], %s241
          %244 = vsyncadd %s239, 0
          %s245 = sadd.s32 %s30, %s29
          %s246 = smul.addr %s245, 8
          %s247 = scalar_lea.hbm %s0, %s246
          %s249 = sshll.u32 %s247, 4
          %s250 = int_to_ptr.hbm [resolvable:$true] %s249
          %s251 = sshll.u32 %s242, 4
          %s252 = int_to_ptr.vmem [resolvable:$true] %s251
          %254 = dma.hbm_to_vmem [thread:$0]  %s250, 128, %s252, %s239
        $region28: #{tpu_custom_call.1} parent=23 // pred_fallthru
          _
      $region24: #{tpu_custom_call.1} parent=5 // pred_fallthru
        _
      %p255 = scmp.le.s32.totalorder 1, %s22
      %p256 = scmp.lt.s32.totalorder %s22, 3
      %p257 = pnand %p255, %p256
      %p258 = pneg %p257
      // Predicated region
      $region29: #{tpu_custom_call.1} parent=5 // pred_check
        _
      $region30: #{tpu_custom_call.1} parent=5 // pred_check_branch
        %260 = sbr.rel (%p257) target = $region32
      $region31: #{tpu_custom_call.1} parent=5 // pred_region
        %s261 = ssub.s32 %s22, 1
        %s262 = sand.u32 %s49, 1
        %s263 = scalar_lea.sflag [#allocation3], %s262
        %s264 = sand.u32 %s49, 1
        %s265 = smul.addr %s264, 8
        %s266 = scalar_lea.vmem [#allocation2], %s265
        // Predicated region
        $region33: #{tpu_custom_call.1} parent=31 // pred_check
          %p267 = pneg %p62
        $region34: #{tpu_custom_call.1} parent=31 // pred_check_branch
          %269 = sbr.rel (%p267) target = $region36
        $region35: #{tpu_custom_call.1} parent=31 // pred_region
          %271 = dma.done %s263, 128
        $region36: #{tpu_custom_call.1} parent=31 // pred_fallthru
          _
        // Predicated region
        $region37: #{tpu_custom_call.1} parent=31 // pred_check
          %p272 = pneg %p83
        $region38: #{tpu_custom_call.1} parent=31 // pred_check_branch
          %274 = sbr.rel (%p272) target = $region40
        $region39: #{tpu_custom_call.1} parent=31 // pred_region
          %276 = dma.done [#allocation6], 1536
        $region40: #{tpu_custom_call.1} parent=31 // pred_fallthru
          _
        // Predicated region
        $region41: #{tpu_custom_call.1} parent=31 // pred_check
          %p277 = pneg %p104
        $region42: #{tpu_custom_call.1} parent=31 // pred_check_branch
          %279 = sbr.rel (%p277) target = $region44
        $region43: #{tpu_custom_call.1} parent=31 // pred_region
          %281 = dma.done [#allocation6], 48
        $region44: #{tpu_custom_call.1} parent=31 // pred_fallthru
          _
        %s282 = sand.u32 %s49, 1
        %s283 = scalar_lea.sflag [#allocation3], %s282
        %s284 = sand.u32 %s49, 1
        %s285 = smul.addr %s284, 8
        %s286 = scalar_lea.vmem [#allocation2], %s285
        %p287 = pneg %p62
        %p288 = pneg %p59
        %p289 = pneg %p83
        %p290 = pneg %p80
        %p291 = pneg %p104
        %p292 = pneg %p101
        %p293 = pneg %p132
        %p294 = pneg %p129
        %s295 = sand.u32 %s119, 1
        %s296 = scalar_lea.sflag [#allocation4], %s295
        %s297 = sand.u32 %s119, 1
        %s298 = smul.addr %s297, 8
        %s299 = scalar_lea.vmem [#allocation8], %s298
        %p300 = pneg %p160
        %p301 = pneg %p157
        %s302 = sand.u32 %s27, 1
        %s303 = scalar_lea.sflag [#allocation10], %s302
        %s304 = sand.u32 %s147, 1
        %s305 = smul.addr %s304, 8
        %s306 = scalar_lea.vmem [#allocation9], %s305
        %p307 = pneg %p188
        %p308 = pneg %p185
        %s309 = sand.u32 %s27, 1
        %s310 = scalar_lea.sflag [#allocation10], %s309
        %s311 = sand.u32 %s175, 1
        %s312 = smul.addr %s311, 8
        %s313 = scalar_lea.vmem [#allocation11], %s312
        %v314 = vld [vmem:[%s266] sm:$0xff]
        %v315 = vld [vmem:[#allocation5] sm:$0xff]
        %v316 = vld [vmem:[#allocation5 + $0x8] sm:$0xff]
        %v317 = vld [vmem:[#allocation5 + $0x10] sm:$0xff]
        %v318 = vld [vmem:[#allocation5 + $0x18] sm:$0xff]
        %v319 = vld [vmem:[#allocation7] sm:$0x1]
        %v321 = vperm.slane %v319, 0
        %vm323 = vcmask 261120
        %v325 = vsel %vm323, %v314, 0
        %327 = vmatpush.msra.mxu0 0.0
        %328 = vmatpush.msra.mxu0 0.0
        %329 = vmatpush.msra.mxu0 0.0
        %330 = vmatpush.msra.mxu0 0.0
        %331 = vmatpush.msra.mxu0 0.0
        %332 = vmatpush.msra.mxu0 0.0
        %333 = vmatpush.msra.mxu0 0.0
        %334 = vmatpush.msra.mxu0 0.0
        %335 = vmatpush.msra.mxu0 0.0
        %336 = vmatpush.msra.mxu0 0.0
        %337 = vmatpush.msra.mxu0 0.0
        %338 = vmatpush.msra.mxu0 0.0
        %339 = vmatpush.msra.mxu0 %v318
        %340 = vmatpush.msra.mxu0 %v317
        %341 = vmatpush.msra.mxu0 %v316
        %342 = vmatpush.msra.mxu0 %v315
        %343 = vmatmul.f32.gmra.mxu0 %v325
        %v344 = vpop.f32.mrf.mxu0
        %v345 = vadd.f32 %v321, %v344
        %346 = vdwg.mxu0
        %v347 = vmul.f32 %v345, 0.35355338
        %s348 = scalar_lea.vmem [#allocation5], 32
        %v349 = vld [vmem:[%s348] sm:$0xff]
        %v350 = vld [vmem:[%s348 + $0x8] sm:$0xff]
        %v351 = vld [vmem:[%s348 + $0x10] sm:$0xff]
        %v352 = vld [vmem:[%s348 + $0x18] sm:$0xff]
        %s353 = scalar_lea.vmem [#allocation7], 1
        %v354 = vld [vmem:[%s353] sm:$0x1]
        %v356 = vperm.slane %v354, 0
        %358 = vmatpush.msra.mxu0 0.0
        %359 = vmatpush.msra.mxu0 0.0
        %360 = vmatpush.msra.mxu0 0.0
        %361 = vmatpush.msra.mxu0 0.0
        %362 = vmatpush.msra.mxu0 0.0
        %363 = vmatpush.msra.mxu0 0.0
        %364 = vmatpush.msra.mxu0 0.0
        %365 = vmatpush.msra.mxu0 0.0
        %366 = vmatpush.msra.mxu0 0.0
        %367 = vmatpush.msra.mxu0 0.0
        %368 = vmatpush.msra.mxu0 0.0
        %369 = vmatpush.msra.mxu0 0.0
        %370 = vmatpush.msra.mxu0 %v352
        %371 = vmatpush.msra.mxu0 %v351
        %372 = vmatpush.msra.mxu0 %v350
        %373 = vmatpush.msra.mxu0 %v349
        %374 = vmatmul.f32.gmra.mxu0 %v325
        %v375 = vpop.f32.mrf.mxu0
        %v376 = vadd.f32 %v356, %v375
        %377 = vdwg.mxu0
        %s378 = scalar_lea.vmem [#allocation5], 64
        %v379 = vld [vmem:[%s378] sm:$0xff]
        %v380 = vld [vmem:[%s378 + $0x8] sm:$0xff]
        %v381 = vld [vmem:[%s378 + $0x10] sm:$0xff]
        %v382 = vld [vmem:[%s378 + $0x18] sm:$0xff]
        %s383 = scalar_lea.vmem [#allocation7], 2
        %v384 = vld [vmem:[%s383] sm:$0x1]
        %v386 = vperm.slane %v384, 0
        %388 = vmatpush.msra.mxu0 0.0
        %389 = vmatpush.msra.mxu0 0.0
        %390 = vmatpush.msra.mxu0 0.0
        %391 = vmatpush.msra.mxu0 0.0
        %392 = vmatpush.msra.mxu0 0.0
        %393 = vmatpush.msra.mxu0 0.0
        %394 = vmatpush.msra.mxu0 0.0
        %395 = vmatpush.msra.mxu0 0.0
        %396 = vmatpush.msra.mxu0 0.0
        %397 = vmatpush.msra.mxu0 0.0
        %398 = vmatpush.msra.mxu0 0.0
        %399 = vmatpush.msra.mxu0 0.0
        %400 = vmatpush.msra.mxu0 %v382
        %401 = vmatpush.msra.mxu0 %v381
        %402 = vmatpush.msra.mxu0 %v380
        %403 = vmatpush.msra.mxu0 %v379
        %404 = vmatmul.f32.gmra.mxu0 %v325
        %v405 = vpop.f32.mrf.mxu0
        %v406 = vadd.f32 %v386, %v405
        %407 = vdwg.mxu0
        %408 = vst.msk [vmem:[%s299] sm:$0xff] %vm323, %v347
        %409 = vst.msk [vmem:[%s306] sm:$0xff] %vm323, %v376
        %410 = vst.msk [vmem:[%s313] sm:$0xff] %vm323, %v406
        %s411 = sand.u32 %s119, 1
        %s412 = scalar_lea.sflag [#allocation4], %s411
        %s413 = sand.u32 %s119, 1
        %s414 = smul.addr %s413, 8
        %s415 = scalar_lea.vmem [#allocation8], %s414
        %s416 = sand.u32 %s27, 1
        %s417 = scalar_lea.sflag [#allocation10], %s416
        %s418 = sand.u32 %s147, 1
        %s419 = smul.addr %s418, 8
        %s420 = scalar_lea.vmem [#allocation9], %s419
        %s421 = sand.u32 %s27, 1
        %s422 = scalar_lea.sflag [#allocation10], %s421
        %s423 = sand.u32 %s175, 1
        %s424 = smul.addr %s423, 8
        %s425 = scalar_lea.vmem [#allocation11], %s424
        // Predicated region
        $region45: #{tpu_custom_call.1} parent=31 // pred_check
          %p426 = pneg %p129
        $region46: #{tpu_custom_call.1} parent=31 // pred_check_branch
          %428 = sbr.rel (%p426) target = $region48
        $region47: #{tpu_custom_call.1} parent=31 // pred_region
          %430 = vsyncadd %s412, 0
          %s431 = sadd.s32 %s32, %s31
          %s432 = smul.addr %s431, 8
          %s433 = scalar_lea.hbm %s3, %s432
          %s435 = sshll.u32 %s415, 4
          %s436 = int_to_ptr.vmem [resolvable:$true] %s435
          %s437 = sshll.u32 %s433, 4
          %s438 = int_to_ptr.hbm [resolvable:$true] %s437
          %440 = dma.vmem_to_hbm [thread:$0]  %s436, 128, %s438, %s412
        $region48: #{tpu_custom_call.1} parent=31 // pred_fallthru
          _
        // Predicated region
        $region49: #{tpu_custom_call.1} parent=31 // pred_check
          %p441 = pneg %p157
        $region50: #{tpu_custom_call.1} parent=31 // pred_check_branch
          %443 = sbr.rel (%p441) target = $region52
        $region51: #{tpu_custom_call.1} parent=31 // pred_region
          %445 = vsyncadd %s417, 0
          %s446 = sadd.s32 %s32, %s31
          %s447 = smul.addr %s446, 8
          %s448 = scalar_lea.hbm %s4, %s447
          %s450 = sshll.u32 %s420, 4
          %s451 = int_to_ptr.vmem [resolvable:$true] %s450
          %s452 = sshll.u32 %s448, 4
          %s453 = int_to_ptr.hbm [resolvable:$true] %s452
          %455 = dma.vmem_to_hbm [thread:$0]  %s451, 128, %s453, %s417
        $region52: #{tpu_custom_call.1} parent=31 // pred_fallthru
          _
        // Predicated region
        $region53: #{tpu_custom_call.1} parent=31 // pred_check
          %p456 = pneg %p185
        $region54: #{tpu_custom_call.1} parent=31 // pred_check_branch
          %458 = sbr.rel (%p456) target = $region56
        $region55: #{tpu_custom_call.1} parent=31 // pred_region
          %460 = vsyncadd %s422, 0
          %s461 = sadd.s32 %s32, %s31
          %s462 = smul.addr %s461, 8
          %s463 = scalar_lea.hbm %s5, %s462
          %s465 = sshll.u32 %s425, 4
          %s466 = int_to_ptr.vmem [resolvable:$true] %s465
          %s467 = sshll.u32 %s463, 4
          %s468 = int_to_ptr.hbm [resolvable:$true] %s467
          %470 = dma.vmem_to_hbm [thread:$0]  %s466, 128, %s468, %s422
        $region56: #{tpu_custom_call.1} parent=31 // pred_fallthru
          _
      $region32: #{tpu_custom_call.1} parent=5 // pred_fallthru
        _
      %p471 = scmp.le.s32.totalorder 2, %s22
      // Predicated region
      $region57: #{tpu_custom_call.1} parent=5 // pred_check
        %p472 = pneg %p471
      $region58: #{tpu_custom_call.1} parent=5 // pred_check_branch
        %474 = sbr.rel (%p472) target = $region60
      $region59: #{tpu_custom_call.1} parent=5 // pred_region
        %s475 = ssub.s32 %s22, 2
        // Predicated region
        $region61: #{tpu_custom_call.1} parent=59 // pred_check
          %p476 = pneg %p135
        $region62: #{tpu_custom_call.1} parent=59 // pred_check_branch
          %478 = sbr.rel (%p476) target = $region64
        $region63: #{tpu_custom_call.1} parent=59 // pred_region
          %s479 = sand.u32 %s120, 1
          %s480 = scalar_lea.sflag [#allocation4], %s479
          %s481 = sand.u32 %s120, 1
          %s482 = smul.addr %s481, 8
          %s483 = scalar_lea.vmem [#allocation8], %s482
          %485 = dma.done %s480, 128
        $region64: #{tpu_custom_call.1} parent=59 // pred_fallthru
          _
        // Predicated region
        $region65: #{tpu_custom_call.1} parent=59 // pred_check
          %p486 = pneg %p163
        $region66: #{tpu_custom_call.1} parent=59 // pred_check_branch
          %488 = sbr.rel (%p486) target = $region68
        $region67: #{tpu_custom_call.1} parent=59 // pred_region
          %s489 = sand.u32 %s28, 1
          %s490 = scalar_lea.sflag [#allocation10], %s489
          %s491 = sand.u32 %s148, 1
          %s492 = smul.addr %s491, 8
          %s493 = scalar_lea.vmem [#allocation9], %s492
          %495 = dma.done %s490, 128
        $region68: #{tpu_custom_call.1} parent=59 // pred_fallthru
          _
        // Predicated region
        $region69: #{tpu_custom_call.1} parent=59 // pred_check
          %p496 = pneg %p191
        $region70: #{tpu_custom_call.1} parent=59 // pred_check_branch
          %498 = sbr.rel (%p496) target = $region72
        $region71: #{tpu_custom_call.1} parent=59 // pred_region
          %s499 = sand.u32 %s28, 1
          %s500 = scalar_lea.sflag [#allocation10], %s499
          %s501 = sand.u32 %s176, 1
          %s502 = smul.addr %s501, 8
          %s503 = scalar_lea.vmem [#allocation11], %s502
          %505 = dma.done %s500, 128
        $region72: #{tpu_custom_call.1} parent=59 // pred_fallthru
          _
      $region60: #{tpu_custom_call.1} parent=5 // pred_fallthru
        _
    $region6: #{tpu_custom_call.1} parent=1 // loop_footer
      %s26 = sadd.s32 1, %s22
    $region7: #{tpu_custom_call.1} parent=1 // loop_footer_branch
      %21 = sbr.rel target = $region3
    $region8: #{tpu_custom_call.1} parent=1 // loop_exit
      _
    %506 = vsyncpa [#allocation3], 1
    %s507 = scalar_lea.sflag [#allocation3], 1
    %508 = vsyncpa %s507, 1
    %509 = vsyncpa [#allocation6], 1
    %510 = vsyncpa [#allocation4], 1
    %s511 = scalar_lea.sflag [#allocation4], 1
    %512 = vsyncpa %s511, 1
    %513 = vsyncpa [#allocation10], 1
    %s514 = scalar_lea.sflag [#allocation10], 1
    %515 = vsyncpa %s514, 1

</llo_original>
